<compile_context>
chip_gen: v6e
topology: v6e:2x2x1
jax: 0.10.0
libtpu: 0.0.40
codegen_flags: <defaults>
</compile_context>

<pallas_src>
import jax
import jax.numpy as jnp
from jax.experimental import pallas as pl
from jax.experimental.pallas import tpu as pltpu


LEAKY_SLOPE = 0.01   # torch.nn.LeakyReLU default negative_slope
BN_EPS = 1e-5        # torch.nn.BatchNorm1d default eps
LANE = 128


def _round_up(n, m):
    return (n + m - 1) // m * m


# ----------------------------------------------------------------------------
# Fused kernel: one grid step == one LatentMLP layer.
# ----------------------------------------------------------------------------
def latent_mlp_fused_kernel(x_ref, w1_ref, gamma_ref, beta_ref, w2_ref, b2_ref,
                            o_ref, x_scr):
    """Per grid step d (layer d):
         h  = x @ W1[d]                       (MXU; b1 dropped: exactly
                                               cancelled by train-mode BN mean)
         y  = h * scale + shift               scale = gamma * rsqrt(var + eps)
                                              shift = beta  - mean * scale
         a  = leaky_relu(y)                   (VPU)
         x' = a @ W2[d] + b2[d]               (MXU) -> carried in VMEM scratch
    """
    d = pl.program_id(0)

    @pl.when(d == 0)
    def _():
        x_scr[...] = x_ref[...].astype(jnp.float32)

    x = x_scr[...]                                   # [N, dim_p] f32 (resident)
    w1 = w1_ref[...]                                 # [dim_p, mlp_p]
    w2 = w2_ref[...]                                 # [mlp_p, dim_p]

    # ---- Linear 1 (bias folded away by BN) ----
    h = jnp.dot(x.astype(w1.dtype), w1,
                preferred_element_type=jnp.float32)  # [N, mlp_p] f32

    # ---- BatchNorm1d (training-mode batch stats) fused to scale/shift ----
    inv_n = 1.0 / x.shape[0]
    mean = jnp.sum(h, axis=0, keepdims=True) * inv_n             # [1, mlp_p]
    e_h2 = jnp.sum(h * h, axis=0, keepdims=True) * inv_n
    var = jnp.maximum(e_h2 - mean * mean, 0.0)                   # biased var
    scale = gamma_ref[...] * jax.lax.rsqrt(var + BN_EPS)         # f32 math
    shift = beta_ref[...] - mean * scale
    y = h * scale + shift

    # ---- LeakyReLU ----
    a = jnp.where(y >= 0.0, y, LEAKY_SLOPE * y)

    # ---- Linear 2 ----
    out = jnp.dot(a.astype(w2.dtype), w2,
                  preferred_element_type=jnp.float32) + b2_ref[...]

    x_scr[...] = out                                 # carry to next layer

    @pl.when(d == pl.num_programs(0) - 1)
    def _():
        o_ref[...] = out.astype(o_ref.dtype)


# ----------------------------------------------------------------------------
# Host-side packing + wrapper
# ----------------------------------------------------------------------------
def _pack_params(params, dim, mlp_dim, dim_p, mlp_p, matmul_dtype):
    """Stack per-layer params to [depth, ...] arrays, zero-padded to lane-dense
    (multiple-of-128) feature dims.  b1 is intentionally discarded: it is
    mathematically cancelled by the training-mode BN mean subtraction."""
    pad_d = dim_p - dim
    pad_m = mlp_p - mlp_dim

    w1s = jnp.stack([p[0] for p in params]).astype(matmul_dtype)     # [D, dim, mlp]
    w1s = jnp.pad(w1s, ((0, 0), (0, pad_d), (0, pad_m)))
    gammas = jnp.stack([p[2].reshape(1, -1) for p in params]).astype(jnp.float32)
    gammas = jnp.pad(gammas, ((0, 0), (0, 0), (0, pad_m)))           # [D, 1, mlp_p]
    betas = jnp.stack([p[3].reshape(1, -1) for p in params]).astype(jnp.float32)
    betas = jnp.pad(betas, ((0, 0), (0, 0), (0, pad_m)))             # [D, 1, mlp_p]
    w2s = jnp.stack([p[4] for p in params]).astype(matmul_dtype)     # [D, mlp, dim]
    w2s = jnp.pad(w2s, ((0, 0), (0, pad_m), (0, pad_d)))
    b2s = jnp.stack([p[5].reshape(1, -1) for p in params]).astype(jnp.float32)
    b2s = jnp.pad(b2s, ((0, 0), (0, 0), (0, pad_d)))                 # [D, 1, dim_p]
    return w1s, gammas, betas, w2s, b2s


def latent_mlp_forward(x, params, *, use_bf16_matmul=False,
                       vmem_limit_bytes=None):
    """Apply all `depth` layers in ONE grid-pipelined pallas_call.

    NOTE: BN training stats couple all N rows, so the whole batch stays
    resident (no tiling over N).  If N ever grows beyond VMEM, the BN
    reduction must become a separate cross-tile stats pass — do not tile N
    naively here.
    """
    n, dim = x.shape
    depth = len(params)
    mlp_dim = params[0][0].shape[1]
    dim_p = max(_round_up(dim, LANE), LANE)
    mlp_p = max(_round_up(mlp_dim, LANE), LANE)
    matmul_dtype = jnp.bfloat16 if use_bf16_matmul else jnp.float32
    itemsize = jnp.dtype(matmul_dtype).itemsize

    w1s, gammas, betas, w2s, b2s = _pack_params(
        params, dim, mlp_dim, dim_p, mlp_p, matmul_dtype)

    # Zero-pad x on the lane (feature) axis.  Padded feature columns stay
    # exactly zero through every layer (zero weight cols, gamma=beta=b2=0).
    x_p = jnp.pad(x.astype(jnp.float32), ((0, 0), (0, dim_p - dim)))

    if vmem_limit_bytes is None:
        per_layer_bytes = (2 * dim_p * mlp_p) * itemsize + (2 * mlp_p + dim_p) * 4
        est = (2 * per_layer_bytes          # double-buffered streamed weights
               + 3 * n * dim_p * 4          # x in, out, resident scratch
               + 2 * n * mlp_p * 4)         # activation temporaries
        vmem_limit_bytes = min(max(4 * est, 8 * 1024 * 1024), 32 * 1024 * 1024)

    flops = depth * (2 * n * dim_p * mlp_p + 2 * n * mlp_p * dim_p)
    bytes_accessed = (2 * x_p.size * 4
                      + (w1s.size + w2s.size) * itemsize
                      + (gammas.size + betas.size + b2s.size) * 4)
    cost = pl.CostEstimate(flops=int(flops),
                           transcendentals=int(depth * mlp_p),
                           bytes_accessed=int(bytes_accessed))

    out_p = pl.pallas_call(
        latent_mlp_fused_kernel,
        out_shape=jax.ShapeDtypeStruct((n, dim_p), x.dtype),
        grid=(depth,),
        in_specs=[
            pl.BlockSpec((n, dim_p), lambda d: (0, 0)),              # x (read @ d==0)
            pl.BlockSpec((None, dim_p, mlp_p), lambda d: (d, 0, 0)),  # W1[d]
            pl.BlockSpec((None, 1, mlp_p), lambda d: (d, 0, 0)),      # gamma[d]
            pl.BlockSpec((None, 1, mlp_p), lambda d: (d, 0, 0)),      # beta[d]
            pl.BlockSpec((None, mlp_p, dim_p), lambda d: (d, 0, 0)),  # W2[d]
            pl.BlockSpec((None, 1, dim_p), lambda d: (d, 0, 0)),      # b2[d]
        ],
        out_specs=pl.BlockSpec((n, dim_p), lambda d: (0, 0)),
        scratch_shapes=[pltpu.VMEM((n, dim_p), jnp.float32)],
        compiler_params=pltpu.CompilerParams(
            dimension_semantics=("arbitrary",),
            vmem_limit_bytes=int(vmem_limit_bytes)),
        cost_estimate=cost,
    )(x_p, w1s, gammas, betas, w2s, b2s)

    return out_p[:, :dim]


# ----------------------------------------------------------------------------
# Synthetic params + pure-JAX reference (mirrors PyTorch training-mode forward)
# ----------------------------------------------------------------------------
def init_params(key, dim, depth, mlp_dim, dtype=jnp.float32):
    """Shapes match nn.Linear / nn.BatchNorm1d (weights kept as [in, out])."""
    params = []
    for d in range(depth):
        k1, k2, key = jax.random.split(key, 3)
        w1 = (jax.random.normal(k1, (dim, mlp_dim), dtype)
              * (1.0 / jnp.sqrt(dim))).astype(dtype)
        b1 = jnp.full((1, mlp_dim), 0.01 * (d + 1), dtype)
        gamma = jnp.full((1, mlp_dim), 1.0, dtype) + 0.05 * (d + 1)
        beta = jnp.full((1, mlp_dim), -0.02 * (d + 1), dtype)
        w2 = (jax.random.normal(k2, (mlp_dim, dim), dtype)
              * (1.0 / jnp.sqrt(mlp_dim))).astype(dtype)
        b2 = jnp.full((1, dim), -0.01 * (d + 1), dtype)
        params.append((w1, b1, gamma, beta, w2, b2))
    return params


def reference_forward(x, params):
    """Faithful reference (includes b1; BN in training mode, biased variance).
    TODO(synk): BatchNorm1d running-stats buffer update (a training-time side
    effect) is not modeled; it does not affect the forward output."""
    for (w1, b1, gamma, beta, w2, b2) in params:
        h = x @ w1 + b1
        mean = jnp.mean(h, axis=0, keepdims=True)
        var = jnp.mean((h - mean) ** 2, axis=0, keepdims=True)
        hn = (h - mean) / jnp.sqrt(var + BN_EPS)
        y = gamma * hn + beta
        a = jnp.where(y >= 0.0, y, LEAKY_SLOPE * y)
        x = a @ w2 + b2
    return x


if __name__ == "__main__":
    # Small shapes consistent with LatentMLP(dim, depth, mlp_dim) on [N, dim].
    N, DIM, DEPTH, MLP_DIM = 8, 32, 3, 64

    key = jax.random.PRNGKey(0)
    kx, kp = jax.random.split(key)
    x = jax.random.normal(kx, (N, DIM), jnp.float32)
    params = init_params(kp, DIM, DEPTH, MLP_DIM)

    ref = reference_forward(x, params)

    # f32 matmul path: tight correctness check.
    out = jax.block_until_ready(latent_mlp_forward(x, params))
    assert out.shape == (N, DIM), out.shape
    assert jnp.allclose(out, ref, atol=1e-4, rtol=1e-4), (
        float(jnp.max(jnp.abs(out - ref))))

    # bf16 matmul-operand path (v6e/v7x MXU-native); loose tolerance since
    # matmul inputs are rounded to bf16 (BN math stays f32).
    out_bf16 = jax.block_until_ready(
        latent_mlp_forward(x, params, use_bf16_matmul=True))
    assert jnp.allclose(out_bf16, ref, atol=1e-1, rtol=1e-1), (
        float(jnp.max(jnp.abs(out_bf16 - ref))))

    print("KERNEL_OK")
</pallas_src>

<mosaic_0001>
module attributes {stable_mosaic.version = 11 : i64} {
  func.func @latent_mlp_fused_kernel(%arg0: i32, %arg1: memref<8x128xf32, #tpu.memory_space<vmem>>, %arg2: memref<1x128x128xf32, #tpu.memory_space<vmem>>, %arg3: memref<1x1x128xf32, #tpu.memory_space<vmem>>, %arg4: memref<1x1x128xf32, #tpu.memory_space<vmem>>, %arg5: memref<1x128x128xf32, #tpu.memory_space<vmem>>, %arg6: memref<1x1x128xf32, #tpu.memory_space<vmem>>, %arg7: memref<8x128xf32, #tpu.memory_space<vmem>>, %arg8: memref<8x128xf32, #tpu.memory_space<vmem>>) attributes {dimension_semantics = [#tpu.dimension_semantics<arbitrary>], iteration_bounds = array<i64: 3>, scalar_prefetch = 0 : i64, scratch_operands = 1 : i64, tpu.core_type = #tpu.core_type<tc>, window_params = [{pipeline_mode = #tpu.pipeline_mode<synchronous>, transform_indices = @transform_0, window_bounds = array<i64: 8, 128>}, {transform_indices = @transform_1, window_bounds = array<i64: 1, 128, 128>}, {transform_indices = @transform_2, window_bounds = array<i64: 1, 1, 128>}, {transform_indices = @transform_3, window_bounds = array<i64: 1, 1, 128>}, {transform_indices = @transform_4, window_bounds = array<i64: 1, 128, 128>}, {transform_indices = @transform_5, window_bounds = array<i64: 1, 1, 128>}, {pipeline_mode = #tpu.pipeline_mode<synchronous>, transform_indices = @transform_6, window_bounds = array<i64: 8, 128>}]} {
    %c0_i32 = arith.constant 0 : i32
    %0 = arith.cmpi eq, %arg0, %c0_i32 : i32
    %1 = arith.extui %0 : i1 to i32
    %c0_i32_0 = arith.constant 0 : i32
    %2 = arith.cmpi ne, %1, %c0_i32_0 : i32
    scf.if %2 {
      %c0_29 = arith.constant 0 : index
      %c0_30 = arith.constant 0 : index
      %50 = vector.load %arg1[%c0_29, %c0_30] : memref<8x128xf32, #tpu.memory_space<vmem>>, vector<8x128xf32>
      %c0_31 = arith.constant 0 : index
      %c0_32 = arith.constant 0 : index
      %51 = vector.load %arg8[%c0_31, %c0_32] : memref<8x128xf32, #tpu.memory_space<vmem>>, vector<8x128xf32>
      tpu.vector_store %arg8[%c0_31, %c0_32], %50 {strides = array<i32>} : memref<8x128xf32, #tpu.memory_space<vmem>>, vector<8x128xf32>,
    } else {
    }
    %c0 = arith.constant 0 : index
    %c0_1 = arith.constant 0 : index
    %3 = vector.load %arg8[%c0, %c0_1] : memref<8x128xf32, #tpu.memory_space<vmem>>, vector<8x128xf32>
    %c0_2 = arith.constant 0 : index
    %c0_3 = arith.constant 0 : index
    %c0_4 = arith.constant 0 : index
    %4 = vector.load %arg2[%c0_2, %c0_3, %c0_4] : memref<1x128x128xf32, #tpu.memory_space<vmem>>, vector<1x128x128xf32>
    %5 = vector.shape_cast %4 : vector<1x128x128xf32> to vector<128x128xf32>
    %c0_5 = arith.constant 0 : index
    %c0_6 = arith.constant 0 : index
    %c0_7 = arith.constant 0 : index
    %6 = vector.load %arg5[%c0_5, %c0_6, %c0_7] : memref<1x128x128xf32, #tpu.memory_space<vmem>>, vector<1x128x128xf32>
    %7 = vector.shape_cast %6 : vector<1x128x128xf32> to vector<128x128xf32>
    %cst = arith.constant dense<0.000000e+00> : vector<8x128xf32>
    %8 = tpu.matmul %3, %5, %cst {dimension_numbers = #tpu.dot_dimension_numbers<[1], [0], [0], [1], [0, 0, 1, 1], [], []>} : vector<8x128xf32>, vector<128x128xf32>, vector<8x128xf32> -> vector<8x128xf32>
    %cst_8 = arith.constant dense<0.000000e+00> : vector<128xf32>
    %9 = vector.multi_reduction <add>, %8, %cst_8 [0] : vector<8x128xf32> to vector<128xf32>
    %10 = vector.shape_cast %9 : vector<128xf32> to vector<1x128xf32>
    %cst_9 = arith.constant 1.250000e-01 : f32
    %11 = vector.broadcast %cst_9 : f32 to vector<1x128xf32>
    %12 = arith.mulf %10, %11 : vector<1x128xf32>
    %13 = arith.mulf %8, %8 : vector<8x128xf32>
    %cst_10 = arith.constant dense<0.000000e+00> : vector<128xf32>
    %14 = vector.multi_reduction <add>, %13, %cst_10 [0] : vector<8x128xf32> to vector<128xf32>
    %15 = vector.shape_cast %14 : vector<128xf32> to vector<1x128xf32>
    %cst_11 = arith.constant 1.250000e-01 : f32
    %16 = vector.broadcast %cst_11 : f32 to vector<1x128xf32>
    %17 = arith.mulf %15, %16 : vector<1x128xf32>
    %18 = arith.mulf %12, %12 : vector<1x128xf32>
    %19 = arith.subf %17, %18 : vector<1x128xf32>
    %cst_12 = arith.constant 0.000000e+00 : f32
    %20 = vector.broadcast %cst_12 : f32 to vector<1x128xf32>
    %21 = arith.maximumf %19, %20 : vector<1x128xf32>
    %c0_13 = arith.constant 0 : index
    %c0_14 = arith.constant 0 : index
    %c0_15 = arith.constant 0 : index
    %22 = vector.load %arg3[%c0_13, %c0_14, %c0_15] : memref<1x1x128xf32, #tpu.memory_space<vmem>>, vector<1x1x128xf32>
    %23 = vector.shape_cast %22 : vector<1x1x128xf32> to vector<1x128xf32>
    %cst_16 = arith.constant 9.99999974E-6 : f32
    %24 = vector.broadcast %cst_16 : f32 to vector<1x128xf32>
    %25 = arith.addf %21, %24 : vector<1x128xf32>
    %26 = math.rsqrt %25 : vector<1x128xf32>
    %27 = arith.mulf %23, %26 : vector<1x128xf32>
    %c0_17 = arith.constant 0 : index
    %c0_18 = arith.constant 0 : index
    %c0_19 = arith.constant 0 : index
    %28 = vector.load %arg4[%c0_17, %c0_18, %c0_19] : memref<1x1x128xf32, #tpu.memory_space<vmem>>, vector<1x1x128xf32>
    %29 = vector.shape_cast %28 : vector<1x1x128xf32> to vector<1x128xf32>
    %30 = arith.mulf %12, %27 : vector<1x128xf32>
    %31 = arith.subf %29, %30 : vector<1x128xf32>
    %32 = vector.broadcast %27 : vector<1x128xf32> to vector<8x128xf32>
    %33 = arith.mulf %8, %32 : vector<8x128xf32>
    %34 = vector.broadcast %31 : vector<1x128xf32> to vector<8x128xf32>
    %35 = arith.addf %33, %34 : vector<8x128xf32>
    %cst_20 = arith.constant 0.000000e+00 : f32
    %36 = vector.broadcast %cst_20 : f32 to vector<8x128xf32>
    %37 = arith.cmpf oge, %35, %36 : vector<8x128xf32>
    %cst_21 = arith.constant 0.00999999977 : f32
    %38 = vector.broadcast %cst_21 : f32 to vector<8x128xf32>
    %39 = arith.mulf %38, %35 : vector<8x128xf32>
    %40 = arith.select %37, %35, %39 : vector<8x128xi1>, vector<8x128xf32>
    %cst_22 = arith.constant dense<0.000000e+00> : vector<8x128xf32>
    %41 = tpu.matmul %40, %7, %cst_22 {dimension_numbers = #tpu.dot_dimension_numbers<[1], [0], [0], [1], [0, 0, 1, 1], [], []>} : vector<8x128xf32>, vector<128x128xf32>, vector<8x128xf32> -> vector<8x128xf32>
    %c0_23 = arith.constant 0 : index
    %c0_24 = arith.constant 0 : index
    %c0_25 = arith.constant 0 : index
    %42 = vector.load %arg6[%c0_23, %c0_24, %c0_25] : memref<1x1x128xf32, #tpu.memory_space<vmem>>, vector<1x1x128xf32>
    %43 = vector.shape_cast %42 : vector<1x1x128xf32> to vector<1x128xf32>
    %44 = vector.broadcast %43 : vector<1x128xf32> to vector<8x128xf32>
    %45 = arith.addf %41, %44 : vector<8x128xf32>
    %c0_26 = arith.constant 0 : index
    %c0_27 = arith.constant 0 : index
    %46 = vector.load %arg8[%c0_26, %c0_27] : memref<8x128xf32, #tpu.memory_space<vmem>>, vector<8x128xf32>
    tpu.vector_store %arg8[%c0_26, %c0_27], %45 {strides = array<i32>} : memref<8x128xf32, #tpu.memory_space<vmem>>, vector<8x128xf32>,
    %c2_i32 = arith.constant 2 : i32
    %47 = arith.cmpi eq, %arg0, %c2_i32 : i32
    %48 = arith.extui %47 : i1 to i32
    %c0_i32_28 = arith.constant 0 : i32
    %49 = arith.cmpi ne, %48, %c0_i32_28 : i32
    scf.if %49 {
      %c0_29 = arith.constant 0 : index
      %c0_30 = arith.constant 0 : index
      %50 = vector.load %arg7[%c0_29, %c0_30] : memref<8x128xf32, #tpu.memory_space<vmem>>, vector<8x128xf32>
      tpu.vector_store %arg7[%c0_29, %c0_30], %45 {strides = array<i32>} : memref<8x128xf32, #tpu.memory_space<vmem>>, vector<8x128xf32>,
    } else {
    }
    return
  }
  func.func @transform_0(%arg0: i32) -> (i32, i32) {
    %c0_i32 = arith.constant 0 : i32
    %c0_i32_0 = arith.constant 0 : i32
    %c0_i32_1 = arith.constant 0 : i32
    return %c0_i32, %c0_i32_0 : i32, i32
  }
  func.func @transform_1(%arg0: i32) -> (i32, i32, i32) {
    %c0_i32 = arith.constant 0 : i32
    %c0_i32_0 = arith.constant 0 : i32
    %c0_i32_1 = arith.constant 0 : i32
    return %arg0, %c0_i32, %c0_i32_0 : i32, i32, i32
  }
  func.func @transform_2(%arg0: i32) -> (i32, i32, i32) {
    %c0_i32 = arith.constant 0 : i32
    %c0_i32_0 = arith.constant 0 : i32
    %c0_i32_1 = arith.constant 0 : i32
    return %arg0, %c0_i32, %c0_i32_0 : i32, i32, i32
  }
  func.func @transform_3(%arg0: i32) -> (i32, i32, i32) {
    %c0_i32 = arith.constant 0 : i32
    %c0_i32_0 = arith.constant 0 : i32
    %c0_i32_1 = arith.constant 0 : i32
    return %arg0, %c0_i32, %c0_i32_0 : i32, i32, i32
  }
  func.func @transform_4(%arg0: i32) -> (i32, i32, i32) {
    %c0_i32 = arith.constant 0 : i32
    %c0_i32_0 = arith.constant 0 : i32
    %c0_i32_1 = arith.constant 0 : i32
    return %arg0, %c0_i32, %c0_i32_0 : i32, i32, i32
  }
  func.func @transform_5(%arg0: i32) -> (i32, i32, i32) {
    %c0_i32 = arith.constant 0 : i32
    %c0_i32_0 = arith.constant 0 : i32
    %c0_i32_1 = arith.constant 0 : i32
    return %arg0, %c0_i32, %c0_i32_0 : i32, i32, i32
  }
  func.func @transform_6(%arg0: i32) -> (i32, i32) {
    %c0_i32 = arith.constant 0 : i32
    %c0_i32_0 = arith.constant 0 : i32
    %c0_i32_1 = arith.constant 0 : i32
    return %c0_i32, %c0_i32_0 : i32, i32
  }
}

</mosaic_0001>

<llo_original>
// kernel: tpu_custom_call.1
$region0: #{tpu_custom_call.1}
  #allocation0 [shape = 'u32[]', space=smem, size = 0x4, offset = 0x4, fixed_abs, tag = 'smem constant byte address 0x4 - core index']
  #allocation1 [shape = 'u32[144,128]{1,0:T(1,128)}', space=vmem, size = 0x12000, scoped, tag = 'internal scratch']
  #allocation2 [shape = 'f32[8,128]{1,0:T(8,128)}', space=vmem, size = 0x1000, scoped, tag = 'scratch operand']
  %s0 = inlined_call_operand.hbm [shape: f32[8,128], index: 0, kind: input, shape index: {}]
  %s1 = inlined_call_operand.hbm [shape: f32[3,128,128], index: 1, kind: input, shape index: {}]
  %s2 = inlined_call_operand.vmem [shape: f32[3,1,128], index: 2, kind: input, shape index: {}]
  %s3 = inlined_call_operand.hbm [shape: f32[3,1,128], index: 3, kind: input, shape index: {}]
  %s4 = inlined_call_operand.hbm [shape: f32[3,128,128], index: 4, kind: input, shape index: {}]
  %s5 = inlined_call_operand.vmem [shape: f32[3,1,128], index: 5, kind: input, shape index: {}]
  %s6 = inlined_call_operand.hbm [shape: f32[8,128], index: 6, kind: output, shape index: {}]
  %s7 = sld [smem:[#allocation0]]
  $region81: #{tpu_custom_call.1} parent=0
    _
  %s9 = ssub.s32 1, %s7
  %s10 = scalar_select 0, %s9, %s7
  $region1: #{tpu_custom_call.1} parent=0
    #allocation3 [shape = 'u8[4096]{0}', space=vmem, size = 0x1000, scoped, tag = 'input window, operand 0, single buffered']
    #allocation4 [shape = 's32[2]{0}', space=sflag, size = 0x8, scoped, tag = 'scoped memory for tpu_custom_call.1']
    #allocation5 [shape = 's32[2]{0}', space=sflag, size = 0x8, scoped, tag = 'scoped memory for tpu_custom_call.1']
    #allocation6 [shape = 'u8[131072]{0}', space=vmem, size = 0x20000, scoped, tag = 'input window, operand 1']
    #allocation7 [shape = 's32[2]{0}', space=sflag, size = 0x8, scoped, tag = 'scoped memory for tpu_custom_call.1']
    #allocation8 [shape = 'u8[1024]{0}', space=vmem, size = 0x400, scoped, tag = 'input window, operand 3']
    #allocation9 [shape = 'u8[131072]{0}', space=vmem, size = 0x20000, scoped, tag = 'input window, operand 4']
    #allocation10 [shape = 's32[2]{0}', space=sflag, size = 0x8, scoped, tag = 'scoped memory for tpu_custom_call.1']
    #allocation11 [shape = 'u8[4096]{0}', space=vmem, size = 0x1000, scoped, tag = 'output window, operand 0, single buffered']
    %11 = vsyncpa [#allocation4], 0
    %12 = vsyncpa [#allocation7], 0
    %s13 = scalar_lea.sflag [#allocation7], 1
    %14 = vsyncpa %s13, 0
    %15 = vsyncpa [#allocation10], 0
    %s16 = scalar_lea.sflag [#allocation10], 1
    %17 = vsyncpa %s16, 0
    %18 = vsyncpa [#allocation5], 0
    loop: start=0, step=1, limit=5
    $region2: #{tpu_custom_call.1} parent=1 // loop_pre_header
      _
    $region3: #{tpu_custom_call.1} parent=1 // loop_header
      %s20 = sphi 0, %s24
      %p21 = scmp.ge.s32.totalorder %s20, 5
      %s28 = sphi 0, %s28
      %s30 = sphi 0, %s28
      %s31 = sphi 0, %s30
      %s45 = sphi 0, %s31
      %s51 = sphi 0, %s53
      %s54 = sphi 0, %s51
      %s55 = sphi 0, %s54
      %s71 = sphi 0, %s55
      %s77 = sphi 0, %s79
      %s80 = sphi 0, %s77
      %s81 = sphi 0, %s80
      %s97 = sphi 0, %s81
      %s103 = sphi 0, %s105
      %s106 = sphi 0, %s103
      %s107 = sphi 0, %s106
      %s123 = sphi 0, %s107
      %s129 = sphi 0, %s131
      %s132 = sphi 0, %s129
      %s133 = sphi 0, %s132
      %s149 = sphi 0, %s133
      %s155 = sphi 0, %s157
      %s158 = sphi 0, %s155
      %s159 = sphi 0, %s158
      %s175 = sphi 0, %s159
      %s179 = sphi 0, %s179
      %s181 = sphi 0, %s179
      %s182 = sphi 0, %s181
      %s196 = sphi 0, %s182
    $region4: #{tpu_custom_call.1} parent=1 // loop_header_branch
      %23 = sbr.rel (%p21) target = $region8
    $region5: #{tpu_custom_call.1} parent=1 // loop_body
      %s25 = ssub.s32 %s20, 1
      %s26 = ssub.s32 %s20, 2
      %s27 = sadd.s32 %s20, 1
      %s29 = sadd.s32 %s28, 1
      %p32 = scmp.eq.s32.totalorder %s20, 2
      %p33 = scmp.ne.s32.totalorder %s28, %s30
      %p34 = scmp.eq.s32.totalorder %s20, 0
      %p35 = por %p33, %p34
      %p36 = scmp.ne.s32.totalorder %s28, %s30
      %p37 = scmp.eq.s32.totalorder %s25, 2
      %p38 = por %p36, %p37
      %p39 = scmp.ne.s32.totalorder %s30, %s31
      %p40 = scmp.eq.s32.totalorder %s25, 0
      %p41 = por %p39, %p40
      %p42 = scmp.ne.s32.totalorder %s30, %s31
      %p43 = scmp.eq.s32.totalorder %s26, 2
      %p44 = por %p42, %p43
      %p46 = scmp.ne.s32.totalorder %s31, %s45
      %p47 = scmp.eq.s32.totalorder %s26, 0
      %p48 = por %p46, %p47
      %s49 = ssub.s32 %s20, %s27
      %p50 = scmp.eq.s32.totalorder %s49, 0
      %s52 = sadd.s32 %s51, 1
      %s53 = scalar_select %p50, %s51, %s52
      %p56 = pneg %p50
      %p57 = scmp.eq.s32.totalorder %s20, 2
      %p58 = por %p56, %p57
      %p59 = scmp.ne.s32.totalorder %s51, %s54
      %p60 = scmp.eq.s32.totalorder %s20, 0
      %p61 = por %p59, %p60
      %p62 = scmp.ne.s32.totalorder %s51, %s54
      %p63 = scmp.eq.s32.totalorder %s25, 2
      %p64 = por %p62, %p63
      %p65 = scmp.ne.s32.totalorder %s54, %s55
      %p66 = scmp.eq.s32.totalorder %s25, 0
      %p67 = por %p65, %p66
      %p68 = scmp.ne.s32.totalorder %s54, %s55
      %p69 = scmp.eq.s32.totalorder %s26, 2
      %p70 = por %p68, %p69
      %p72 = scmp.ne.s32.totalorder %s55, %s71
      %p73 = scmp.eq.s32.totalorder %s26, 0
      %p74 = por %p72, %p73
      %s75 = ssub.s32 %s20, %s27
      %p76 = scmp.eq.s32.totalorder %s75, 0
      %s78 = sadd.s32 %s77, 1
      %s79 = scalar_select %p76, %s77, %s78
      %p82 = pneg %p76
      %p83 = scmp.eq.s32.totalorder %s20, 2
      %p84 = por %p82, %p83
      %p85 = scmp.ne.s32.totalorder %s77, %s80
      %p86 = scmp.eq.s32.totalorder %s20, 0
      %p87 = por %p85, %p86
      %p88 = scmp.ne.s32.totalorder %s77, %s80
      %p89 = scmp.eq.s32.totalorder %s25, 2
      %p90 = por %p88, %p89
      %p91 = scmp.ne.s32.totalorder %s80, %s81
      %p92 = scmp.eq.s32.totalorder %s25, 0
      %p93 = por %p91, %p92
      %p94 = scmp.ne.s32.totalorder %s80, %s81
      %p95 = scmp.eq.s32.totalorder %s26, 2
      %p96 = por %p94, %p95
      %p98 = scmp.ne.s32.totalorder %s81, %s97
      %p99 = scmp.eq.s32.totalorder %s26, 0
      %p100 = por %p98, %p99
      %s101 = ssub.s32 %s20, %s27
      %p102 = scmp.eq.s32.totalorder %s101, 0
      %s104 = sadd.s32 %s103, 1
      %s105 = scalar_select %p102, %s103, %s104
      %p108 = pneg %p102
      %p109 = scmp.eq.s32.totalorder %s20, 2
      %p110 = por %p108, %p109
      %p111 = scmp.ne.s32.totalorder %s103, %s106
      %p112 = scmp.eq.s32.totalorder %s20, 0
      %p113 = por %p111, %p112
      %p114 = scmp.ne.s32.totalorder %s103, %s106
      %p115 = scmp.eq.s32.totalorder %s25, 2
      %p116 = por %p114, %p115
      %p117 = scmp.ne.s32.totalorder %s106, %s107
      %p118 = scmp.eq.s32.totalorder %s25, 0
      %p119 = por %p117, %p118
      %p120 = scmp.ne.s32.totalorder %s106, %s107
      %p121 = scmp.eq.s32.totalorder %s26, 2
      %p122 = por %p120, %p121
      %p124 = scmp.ne.s32.totalorder %s107, %s123
      %p125 = scmp.eq.s32.totalorder %s26, 0
      %p126 = por %p124, %p125
      %s127 = ssub.s32 %s20, %s27
      %p128 = scmp.eq.s32.totalorder %s127, 0
      %s130 = sadd.s32 %s129, 1
      %s131 = scalar_select %p128, %s129, %s130
      %p134 = pneg %p128
      %p135 = scmp.eq.s32.totalorder %s20, 2
      %p136 = por %p134, %p135
      %p137 = scmp.ne.s32.totalorder %s129, %s132
      %p138 = scmp.eq.s32.totalorder %s20, 0
      %p139 = por %p137, %p138
      %p140 = scmp.ne.s32.totalorder %s129, %s132
      %p141 = scmp.eq.s32.totalorder %s25, 2
      %p142 = por %p140, %p141
      %p143 = scmp.ne.s32.totalorder %s132, %s133
      %p144 = scmp.eq.s32.totalorder %s25, 0
      %p145 = por %p143, %p144
      %p146 = scmp.ne.s32.totalorder %s132, %s133
      %p147 = scmp.eq.s32.totalorder %s26, 2
      %p148 = por %p146, %p147
      %p150 = scmp.ne.s32.totalorder %s133, %s149
      %p151 = scmp.eq.s32.totalorder %s26, 0
      %p152 = por %p150, %p151
      %s153 = ssub.s32 %s20, %s27
      %p154 = scmp.eq.s32.totalorder %s153, 0
      %s156 = sadd.s32 %s155, 1
      %s157 = scalar_select %p154, %s155, %s156
      %p160 = pneg %p154
      %p161 = scmp.eq.s32.totalorder %s20, 2
      %p162 = por %p160, %p161
      %p163 = scmp.ne.s32.totalorder %s155, %s158
      %p164 = scmp.eq.s32.totalorder %s20, 0
      %p165 = por %p163, %p164
      %p166 = scmp.ne.s32.totalorder %s155, %s158
      %p167 = scmp.eq.s32.totalorder %s25, 2
      %p168 = por %p166, %p167
      %p169 = scmp.ne.s32.totalorder %s158, %s159
      %p170 = scmp.eq.s32.totalorder %s25, 0
      %p171 = por %p169, %p170
      %p172 = scmp.ne.s32.totalorder %s158, %s159
      %p173 = scmp.eq.s32.totalorder %s26, 2
      %p174 = por %p172, %p173
      %p176 = scmp.ne.s32.totalorder %s159, %s175
      %p177 = scmp.eq.s32.totalorder %s26, 0
      %p178 = por %p176, %p177
      %s180 = sadd.s32 %s179, 1
      %p183 = scmp.eq.s32.totalorder %s20, 2
      %p184 = scmp.ne.s32.totalorder %s179, %s181
      %p185 = scmp.eq.s32.totalorder %s20, 0
      %p186 = por %p184, %p185
      %p187 = scmp.ne.s32.totalorder %s179, %s181
      %p188 = scmp.eq.s32.totalorder %s25, 2
      %p189 = por %p187, %p188
      %p190 = scmp.ne.s32.totalorder %s181, %s182
      %p191 = scmp.eq.s32.totalorder %s25, 0
      %p192 = por %p190, %p191
      %p193 = scmp.ne.s32.totalorder %s181, %s182
      %p194 = scmp.eq.s32.totalorder %s26, 2
      %p195 = por %p193, %p194
      %p197 = scmp.ne.s32.totalorder %s182, %s196
      %p198 = scmp.eq.s32.totalorder %s26, 0
      %p199 = por %p197, %p198
      %p200 = scmp.le.s32.totalorder 1, %s20
      %p201 = scmp.lt.s32.totalorder %s20, 4
      %p202 = pnand %p200, %p201
      %p203 = pneg %p202
      // Predicated region
      $region9: #{tpu_custom_call.1} parent=5 // pred_check
        _
      $region10: #{tpu_custom_call.1} parent=5 // pred_check_branch
        %205 = sbr.rel (%p202) target = $region12
      $region11: #{tpu_custom_call.1} parent=5 // pred_region
        %s206 = ssub.s32 %s20, 1
        // Predicated region
        $region13: #{tpu_custom_call.1} parent=11 // pred_check
          %p207 = pneg %p41
        $region14: #{tpu_custom_call.1} parent=11 // pred_check_branch
          %209 = sbr.rel (%p207) target = $region16
        $region15: #{tpu_custom_call.1} parent=11 // pred_region
          %s211 = ssub.s32 128, 128
          %212 = vsyncadd [#allocation4], %s211
          %s214 = sshll.u32 [#allocation3], 4
          %s215 = int_to_ptr.vmem [resolvable:$true] %s214
          %217 = dma.hbm_to_vmem [thread:$0]  %s0, 128, %s215, [#allocation4]
        $region16: #{tpu_custom_call.1} parent=11 // pred_fallthru
          _
      $region12: #{tpu_custom_call.1} parent=5 // pred_fallthru
        _
      %p218 = scmp.lt.s32.totalorder %s20, 3
      // Predicated region
      $region17: #{tpu_custom_call.1} parent=5 // pred_check
        %p219 = pneg %p218
      $region18: #{tpu_custom_call.1} parent=5 // pred_check_branch
        %221 = sbr.rel (%p219) target = $region20
      $region19: #{tpu_custom_call.1} parent=5 // pred_region
        // Predicated region
        $region21: #{tpu_custom_call.1} parent=19 // pred_check
          %p222 = pneg %p61
        $region22: #{tpu_custom_call.1} parent=19 // pred_check_branch
          %224 = sbr.rel (%p222) target = $region24
        $region23: #{tpu_custom_call.1} parent=19 // pred_region
          %s225 = sand.u32 %s20, 1
          %s226 = scalar_lea.sflag [#allocation7], %s225
          %s227 = sand.u32 %s51, 1
          %s228 = smul.addr %s227, 128
          %s229 = scalar_lea.vmem [#allocation6], %s228
          %s231 = ssub.s32 2048, 2048
          %232 = vsyncadd %s226, %s231
          %s233 = smul.addr %s20, 16
          %s234 = smul.addr %s233, 128
          %s235 = scalar_lea.hbm %s1, %s234
          %s236 = sshll.u32 %s229, 4
          %s237 = int_to_ptr.vmem [resolvable:$true] %s236
          %242 = dma.hbm_to_vmem [thread:$0]  %s235, 2048, %s237, %s226, 128, 128, 8
        $region24: #{tpu_custom_call.1} parent=19 // pred_fallthru
          _
        // Predicated region
        $region25: #{tpu_custom_call.1} parent=19 // pred_check
          %p243 = pneg %p87
        $region26: #{tpu_custom_call.1} parent=19 // pred_check_branch
          %245 = sbr.rel (%p243) target = $region28
        $region27: #{tpu_custom_call.1} parent=19 // pred_region
          %p246 = scmp.lt.s32.totalorder %s20, 2
          %s247 = scalar_select %p246, %s20, 2
          %s248 = scalar_lea.vmem %s2, %s247
        $region28: #{tpu_custom_call.1} parent=19 // pred_fallthru
          _
        // Predicated region
        $region29: #{tpu_custom_call.1} parent=19 // pred_check
          %p249 = pneg %p113
        $region30: #{tpu_custom_call.1} parent=19 // pred_check_branch
          %251 = sbr.rel (%p249) target = $region32
        $region31: #{tpu_custom_call.1} parent=19 // pred_region
          %s252 = sand.u32 %s20, 1
          %s253 = scalar_lea.sflag [#allocation7], %s252
          %s254 = sand.u32 %s103, 1
          %s255 = scalar_lea.vmem [#allocation8], %s254
          %s257 = ssub.s32 16, 16
          %258 = vsyncadd %s253, %s257
          %s259 = smul.addr %s20, 16
          %s260 = scalar_lea.hbm %s3, %s259
          %s262 = sshll.u32 %s255, 4
          %s263 = int_to_ptr.vmem [resolvable:$true] %s262
          %265 = dma.hbm_to_vmem [thread:$0]  %s260, 16, %s263, %s253
        $region32: #{tpu_custom_call.1} parent=19 // pred_fallthru
          _
        // Predicated region
        $region33: #{tpu_custom_call.1} parent=19 // pred_check
          %p266 = pneg %p139
        $region34: #{tpu_custom_call.1} parent=19 // pred_check_branch
          %268 = sbr.rel (%p266) target = $region36
        $region35: #{tpu_custom_call.1} parent=19 // pred_region
          %s269 = sand.u32 %s129, 1
          %s270 = scalar_lea.sflag [#allocation10], %s269
          %s271 = sand.u32 %s129, 1
          %s272 = smul.addr %s271, 128
          %s273 = scalar_lea.vmem [#allocation9], %s272
          %s275 = ssub.s32 2048, 2048
          %276 = vsyncadd %s270, %s275
          %s277 = smul.addr %s20, 16
          %s278 = smul.addr %s277, 128
          %s279 = scalar_lea.hbm %s4, %s278
          %s280 = sshll.u32 %s273, 4
          %s281 = int_to_ptr.vmem [resolvable:$true] %s280
          %286 = dma.hbm_to_vmem [thread:$0]  %s279, 2048, %s281, %s270, 128, 128, 8
        $region36: #{tpu_custom_call.1} parent=19 // pred_fallthru
          _
        // Predicated region
        $region37: #{tpu_custom_call.1} parent=19 // pred_check
          %p287 = pneg %p165
        $region38: #{tpu_custom_call.1} parent=19 // pred_check_branch
          %289 = sbr.rel (%p287) target = $region40
        $region39: #{tpu_custom_call.1} parent=19 // pred_region
          %p290 = scmp.lt.s32.totalorder %s20, 2
          %s291 = scalar_select %p290, %s20, 2
          %s292 = scalar_lea.vmem %s5, %s291
        $region40: #{tpu_custom_call.1} parent=19 // pred_fallthru
          _
      $region20: #{tpu_custom_call.1} parent=5 // pred_fallthru
        _
      %p293 = scmp.le.s32.totalorder 1, %s20
      %p294 = scmp.lt.s32.totalorder %s20, 4
      %p295 = pnand %p293, %p294
      %p296 = pneg %p295
      // Predicated region
      $region41: #{tpu_custom_call.1} parent=5 // pred_check
        _
      $region42: #{tpu_custom_call.1} parent=5 // pred_check_branch
        %298 = sbr.rel (%p295) target = $region44
      $region43: #{tpu_custom_call.1} parent=5 // pred_region
        %s299 = ssub.s32 %s20, 1
        // Predicated region
        $region45: #{tpu_custom_call.1} parent=43 // pred_check
          %p300 = pneg %p41
        $region46: #{tpu_custom_call.1} parent=43 // pred_check_branch
          %302 = sbr.rel (%p300) target = $region48
        $region47: #{tpu_custom_call.1} parent=43 // pred_region
          %303 = dma.done [#allocation4], 128
        $region48: #{tpu_custom_call.1} parent=43 // pred_fallthru
          _
        %s304 = sand.u32 %s25, 1
        %s305 = scalar_lea.sflag [#allocation7], %s304
        %s306 = sand.u32 %s54, 1
        %s307 = smul.addr %s306, 128
        %s308 = scalar_lea.vmem [#allocation6], %s307
        // Predicated region
        $region49: #{tpu_custom_call.1} parent=43 // pred_check
          %p309 = pneg %p67
        $region50: #{tpu_custom_call.1} parent=43 // pred_check_branch
          %311 = sbr.rel (%p309) target = $region52
        $region51: #{tpu_custom_call.1} parent=43 // pred_region
          %312 = dma.done %s305, 2048
        $region52: #{tpu_custom_call.1} parent=43 // pred_fallthru
          _
        %s313 = sand.u32 %s25, 1
        %s314 = scalar_lea.sflag [#allocation7], %s313
        %s315 = sand.u32 %s106, 1
        %s316 = scalar_lea.vmem [#allocation8], %s315
        // Predicated region
        $region53: #{tpu_custom_call.1} parent=43 // pred_check
          %p317 = pneg %p119
        $region54: #{tpu_custom_call.1} parent=43 // pred_check_branch
          %319 = sbr.rel (%p317) target = $region56
        $region55: #{tpu_custom_call.1} parent=43 // pred_region
          %320 = dma.done %s314, 16
        $region56: #{tpu_custom_call.1} parent=43 // pred_fallthru
          _
        %s321 = sand.u32 %s132, 1
        %s322 = scalar_lea.sflag [#allocation10], %s321
        %s323 = sand.u32 %s132, 1
        %s324 = smul.addr %s323, 128
        %s325 = scalar_lea.vmem [#allocation9], %s324
        // Predicated region
        $region57: #{tpu_custom_call.1} parent=43 // pred_check
          %p326 = pneg %p145
        $region58: #{tpu_custom_call.1} parent=43 // pred_check_branch
          %328 = sbr.rel (%p326) target = $region60
        $region59: #{tpu_custom_call.1} parent=43 // pred_region
          %329 = dma.done %s322, 2048
        $region60: #{tpu_custom_call.1} parent=43 // pred_fallthru
          _
        %p330 = pneg %p41
        %p331 = pneg %p38
        %s332 = sand.u32 %s25, 1
        %s333 = scalar_lea.sflag [#allocation7], %s332
        %s334 = sand.u32 %s54, 1
        %s335 = smul.addr %s334, 128
        %s336 = scalar_lea.vmem [#allocation6], %s335
        %p337 = pneg %p67
        %p338 = pneg %p64
        %p339 = scmp.lt.s32.totalorder %s25, 2
        %s340 = scalar_select %p339, %s25, 2
        %s341 = scalar_lea.vmem %s2, %s340
        %p342 = pneg %p93
        %p343 = pneg %p90
        %s344 = sand.u32 %s25, 1
        %s345 = scalar_lea.sflag [#allocation7], %s344
        %s346 = sand.u32 %s106, 1
        %s347 = scalar_lea.vmem [#allocation8], %s346
        %p348 = pneg %p119
        %p349 = pneg %p116
        %s350 = sand.u32 %s132, 1
        %s351 = scalar_lea.sflag [#allocation10], %s350
        %s352 = sand.u32 %s132, 1
        %s353 = smul.addr %s352, 128
        %s354 = scalar_lea.vmem [#allocation9], %s353
        %p355 = pneg %p145
        %p356 = pneg %p142
        %p357 = scmp.lt.s32.totalorder %s25, 2
        %s358 = scalar_select %p357, %s25, 2
        %s359 = scalar_lea.vmem %s5, %s358
        %p360 = pneg %p171
        %p361 = pneg %p168
        %p362 = pneg %p192
        %p363 = pneg %p189
        %p364 = scmp.lt.s32.totalorder %s25, 2
        %s365 = scalar_select %p364, %s25, 2
        %s366 = scalar_lea.vmem %s2, %s365
        %p367 = scmp.lt.s32.totalorder %s25, 2
        %s368 = scalar_select %p367, %s25, 2
        %s369 = scalar_lea.vmem %s5, %s368
        %p370 = scmp.eq.s32.totalorder %s25, 0
        // Predicated region
        $region61: #{tpu_custom_call.1} parent=43 // pred_check
          %p371 = pneg %p370
        $region62: #{tpu_custom_call.1} parent=43 // pred_check_branch
          %373 = sbr.rel (%p371) target = $region64
        $region63: #{tpu_custom_call.1} parent=43 // pred_region
          %v374 = vld [vmem:[#allocation3] sm:$0xff]
          %375 = vst [vmem:[#allocation2] sm:$0xff] %v374
        $region64: #{tpu_custom_call.1} parent=43 // pred_fallthru
          _
        %v376 = vld [vmem:[#allocation2] sm:$0xff]
        %v377 = vld [vmem:[%s308] sm:$0xff]
        %v378 = vld [vmem:[%s308 + $0x8] sm:$0xff]
        %v379 = vld [vmem:[%s308 + $0x10] sm:$0xff]
        %v380 = vld [vmem:[%s308 + $0x18] sm:$0xff]
        %v381 = vld [vmem:[%s308 + $0x20] sm:$0xff]
        %v382 = vld [vmem:[%s308 + $0x28] sm:$0xff]
        %v383 = vld [vmem:[%s308 + $0x30] sm:$0xff]
        %v384 = vld [vmem:[%s308 + $0x38] sm:$0xff]
        %v385 = vld [vmem:[%s308 + $0x40] sm:$0xff]
        %v386 = vld [vmem:[%s308 + $0x48] sm:$0xff]
        %v387 = vld [vmem:[%s308 + $0x50] sm:$0xff]
        %v388 = vld [vmem:[%s308 + $0x58] sm:$0xff]
        %v389 = vld [vmem:[%s308 + $0x60] sm:$0xff]
        %v390 = vld [vmem:[%s308 + $0x68] sm:$0xff]
        %v391 = vld [vmem:[%s308 + $0x70] sm:$0xff]
        %v392 = vld [vmem:[%s308 + $0x78] sm:$0xff]
        %v393 = vld [vmem:[%s325] sm:$0xff]
        %v394 = vld [vmem:[%s325 + $0x8] sm:$0xff]
        %v395 = vld [vmem:[%s325 + $0x10] sm:$0xff]
        %v396 = vld [vmem:[%s325 + $0x18] sm:$0xff]
        %v397 = vld [vmem:[%s325 + $0x20] sm:$0xff]
        %v398 = vld [vmem:[%s325 + $0x28] sm:$0xff]
        %v399 = vld [vmem:[%s325 + $0x30] sm:$0xff]
        %v400 = vld [vmem:[%s325 + $0x38] sm:$0xff]
        %v401 = vld [vmem:[%s325 + $0x40] sm:$0xff]
        %v402 = vld [vmem:[%s325 + $0x48] sm:$0xff]
        %v403 = vld [vmem:[%s325 + $0x50] sm:$0xff]
        %v404 = vld [vmem:[%s325 + $0x58] sm:$0xff]
        %v405 = vld [vmem:[%s325 + $0x60] sm:$0xff]
        %v406 = vld [vmem:[%s325 + $0x68] sm:$0xff]
        %v407 = vld [vmem:[%s325 + $0x70] sm:$0xff]
        %v408 = vld [vmem:[%s325 + $0x78] sm:$0xff]
        %409 = vmatprep.subr.mxu0 0.0
        %410 = vmatpush1.msra.mxu0 %v392
        %411 = vmatprep.subr.mxu0 0.0
        %412 = vmatpush1.msra.mxu0 %v391
        %413 = vmatprep.subr.mxu0 0.0
        %414 = vmatpush1.msra.mxu0 %v390
        %415 = vmatprep.subr.mxu0 0.0
        %416 = vmatpush1.msra.mxu0 %v389
        %417 = vmatprep.subr.mxu0 0.0
        %418 = vmatpush1.msra.mxu0 %v388
        %419 = vmatprep.subr.mxu0 0.0
        %420 = vmatpush1.msra.mxu0 %v387
        %421 = vmatprep.subr.mxu0 0.0
        %422 = vmatpush1.msra.mxu0 %v386
        %423 = vmatprep.subr.mxu0 0.0
        %424 = vmatpush1.msra.mxu0 %v385
        %425 = vmatprep.subr.mxu0 0.0
        %426 = vmatpush1.msra.mxu0 %v384
        %427 = vmatprep.subr.mxu0 0.0
        %428 = vmatpush1.msra.mxu0 %v383
        %429 = vmatprep.subr.mxu0 0.0
        %430 = vmatpush1.msra.mxu0 %v382
        %431 = vmatprep.subr.mxu0 0.0
        %432 = vmatpush1.msra.mxu0 %v381
        %433 = vmatprep.subr.mxu0 0.0
        %434 = vmatpush1.msra.mxu0 %v380
        %435 = vmatprep.subr.mxu0 0.0
        %436 = vmatpush1.msra.mxu0 %v379
        %437 = vmatprep.subr.mxu0 0.0
        %438 = vmatpush1.msra.mxu0 %v378
        %439 = vmatprep.subr.mxu0 0.0
        %440 = vmatpush1.msra.mxu0 %v377
        %441 = vmatprep.subr.mxu0 0.0
        %442 = vmatpush2.msra.mxu0 0.0
        %443 = vmatprep.subr.mxu0 0.0
        %444 = vmatpush2.msra.mxu0 0.0
        %445 = vmatprep.subr.mxu0 0.0
        %446 = vmatpush2.msra.mxu0 0.0
        %447 = vmatprep.subr.mxu0 0.0
        %448 = vmatpush2.msra.mxu0 0.0
        %449 = vmatprep.subr.mxu0 0.0
        %450 = vmatpush2.msra.mxu0 0.0
        %451 = vmatprep.subr.mxu0 0.0
        %452 = vmatpush2.msra.mxu0 0.0
        %453 = vmatprep.subr.mxu0 0.0
        %454 = vmatpush2.msra.mxu0 0.0
        %455 = vmatprep.subr.mxu0 0.0
        %456 = vmatpush2.msra.mxu0 0.0
        %457 = vmatprep.subr.mxu0 0.0
        %458 = vmatpush2.msra.mxu0 0.0
        %459 = vmatprep.subr.mxu0 0.0
        %460 = vmatpush2.msra.mxu0 0.0
        %461 = vmatprep.subr.mxu0 0.0
        %462 = vmatpush2.msra.mxu0 0.0
        %463 = vmatprep.subr.mxu0 0.0
        %464 = vmatpush2.msra.mxu0 0.0
        %465 = vmatprep.subr.mxu0 0.0
        %466 = vmatpush2.msra.mxu0 0.0
        %467 = vmatprep.subr.mxu0 0.0
        %468 = vmatpush2.msra.mxu0 0.0
        %469 = vmatprep.subr.mxu0 0.0
        %470 = vmatpush2.msra.mxu0 0.0
        %471 = vmatprep.subr.mxu0 0.0
        %472 = vmatpush2.msra.mxu0 0.0
        %473 = vmatprep.mubr.f32.mxu0 0.0
        %474 = vmatmul.mubr.f32.gmra.mxu0 %v376
        %v475 = vpop.f32.mrf.mxu0
        %v476 = vadd.f32 0.0, %v475
        %v477 = vpop.f32.mrf.mxu0
        %478 = vdwg.mxu0
        %v479 = vrot.slane %v476, 4
        %v480 = vadd.f32 %v476, %v479
        %v481 = vrot.slane %v480, 2
        %v482 = vadd.f32 %v480, %v481
        %v483 = vrot.slane %v482, 1
        %v484 = vadd.f32 %v482, %v483
        %v485 = vmul.f32 %v484, 0.125
        %v486 = vmul.f32 %v476, %v476
        %v487 = vrot.slane %v486, 4
        %v488 = vadd.f32 %v486, %v487
        %v489 = vrot.slane %v488, 2
        %v490 = vadd.f32 %v488, %v489
        %v491 = vrot.slane %v490, 1
        %v492 = vadd.f32 %v490, %v491
        %v493 = vmul.f32 %v492, 0.125
        %v494 = vmul.f32 %v485, %v485
        %v495 = vsub.f32 %v493, %v494
        %v496 = vmax.f32 %v495, 0.0
        %v497 = vld [vmem:[%s366] sm:$0x1]
        %v498 = vadd.f32 %v496, 1e-05
        %v499 = vrsqrt.pop %v498
        %v500 = vmul.f32 %v497, %v499
        %v501 = vld [vmem:[%s316] sm:$0x1]
        %v502 = vmul.f32 %v485, %v500
        %v503 = vsub.f32 %v501, %v502
        %v505 = vlaneseq
        %v506 = vshrl.u32 %v505, 7
        %v507 = vsub.s32 0, %v506
        %v508 = vrot.slane %v500, %v507
        %v510 = vmul.f32 %v476, %v508
        %v512 = vlaneseq
        %v513 = vshrl.u32 %v512, 7
        %v514 = vsub.s32 0, %v513
        %v515 = vrot.slane %v503, %v514
        %v517 = vadd.f32 %v510, %v515
        %vm518 = vcmp.ge.f32.partialorder %v517, 0.0
        %v519 = vmul.f32 %v517, 0.01
        %v520 = vsel %vm518, %v517, %v519
        %v521 = vld [vmem:[%s369] sm:$0x1]
        %v523 = vlaneseq
        %v524 = vshrl.u32 %v523, 7
        %v525 = vsub.s32 0, %v524
        %v526 = vrot.slane %v521, %v525
        %528 = vmatprep.subr.mxu0 0.0
        %529 = vmatpush1.msra.mxu0 %v408
        %530 = vmatprep.subr.mxu0 0.0
        %531 = vmatpush1.msra.mxu0 %v407
        %532 = vmatprep.subr.mxu0 0.0
        %533 = vmatpush1.msra.mxu0 %v406
        %534 = vmatprep.subr.mxu0 0.0
        %535 = vmatpush1.msra.mxu0 %v405
        %536 = vmatprep.subr.mxu0 0.0
        %537 = vmatpush1.msra.mxu0 %v404
        %538 = vmatprep.subr.mxu0 0.0
        %539 = vmatpush1.msra.mxu0 %v403
        %540 = vmatprep.subr.mxu0 0.0
        %541 = vmatpush1.msra.mxu0 %v402
        %542 = vmatprep.subr.mxu0 0.0
        %543 = vmatpush1.msra.mxu0 %v401
        %544 = vmatprep.subr.mxu0 0.0
        %545 = vmatpush1.msra.mxu0 %v400
        %546 = vmatprep.subr.mxu0 0.0
        %547 = vmatpush1.msra.mxu0 %v399
        %548 = vmatprep.subr.mxu0 0.0
        %549 = vmatpush1.msra.mxu0 %v398
        %550 = vmatprep.subr.mxu0 0.0
        %551 = vmatpush1.msra.mxu0 %v397
        %552 = vmatprep.subr.mxu0 0.0
        %553 = vmatpush1.msra.mxu0 %v396
        %554 = vmatprep.subr.mxu0 0.0
        %555 = vmatpush1.msra.mxu0 %v395
        %556 = vmatprep.subr.mxu0 0.0
        %557 = vmatpush1.msra.mxu0 %v394
        %558 = vmatprep.subr.mxu0 0.0
        %559 = vmatpush1.msra.mxu0 %v393
        %560 = vmatprep.subr.mxu0 0.0
        %561 = vmatpush2.msra.mxu0 0.0
        %562 = vmatprep.subr.mxu0 0.0
        %563 = vmatpush2.msra.mxu0 0.0
        %564 = vmatprep.subr.mxu0 0.0
        %565 = vmatpush2.msra.mxu0 0.0
        %566 = vmatprep.subr.mxu0 0.0
        %567 = vmatpush2.msra.mxu0 0.0
        %568 = vmatprep.subr.mxu0 0.0
        %569 = vmatpush2.msra.mxu0 0.0
        %570 = vmatprep.subr.mxu0 0.0
        %571 = vmatpush2.msra.mxu0 0.0
        %572 = vmatprep.subr.mxu0 0.0
        %573 = vmatpush2.msra.mxu0 0.0
        %574 = vmatprep.subr.mxu0 0.0
        %575 = vmatpush2.msra.mxu0 0.0
        %576 = vmatprep.subr.mxu0 0.0
        %577 = vmatpush2.msra.mxu0 0.0
        %578 = vmatprep.subr.mxu0 0.0
        %579 = vmatpush2.msra.mxu0 0.0
        %580 = vmatprep.subr.mxu0 0.0
        %581 = vmatpush2.msra.mxu0 0.0
        %582 = vmatprep.subr.mxu0 0.0
        %583 = vmatpush2.msra.mxu0 0.0
        %584 = vmatprep.subr.mxu0 0.0
        %585 = vmatpush2.msra.mxu0 0.0
        %586 = vmatprep.subr.mxu0 0.0
        %587 = vmatpush2.msra.mxu0 0.0
        %588 = vmatprep.subr.mxu0 0.0
        %589 = vmatpush2.msra.mxu0 0.0
        %590 = vmatprep.subr.mxu0 0.0
        %591 = vmatpush2.msra.mxu0 0.0
        %592 = vmatprep.mubr.f32.mxu0 0.0
        %593 = vmatmul.mubr.f32.gmra.mxu0 %v520
        %v594 = vpop.f32.mrf.mxu0
        %v595 = vadd.f32 %v526, %v594
        %v596 = vpop.f32.mrf.mxu0
        %597 = vdwg.mxu0
        %598 = vst [vmem:[#allocation2] sm:$0xff] %v595
        %p599 = scmp.eq.s32.totalorder %s25, 2
        // Predicated region
        $region65: #{tpu_custom_call.1} parent=43 // pred_check
          %p600 = pneg %p599
        $region66: #{tpu_custom_call.1} parent=43 // pred_check_branch
          %602 = sbr.rel (%p600) target = $region68
        $region67: #{tpu_custom_call.1} parent=43 // pred_region
          %603 = vst [vmem:[#allocation11] sm:$0xff] %v595
        $region68: #{tpu_custom_call.1} parent=43 // pred_fallthru
          _
        // Predicated region
        $region69: #{tpu_custom_call.1} parent=43 // pred_check
          %p604 = pneg %p189
        $region70: #{tpu_custom_call.1} parent=43 // pred_check_branch
          %606 = sbr.rel (%p604) target = $region72
        $region71: #{tpu_custom_call.1} parent=43 // pred_region
          %s608 = ssub.s32 128, 128
          %609 = vsyncadd [#allocation5], %s608
          %s611 = sshll.u32 [#allocation11], 4
          %s612 = int_to_ptr.vmem [resolvable:$true] %s611
          %614 = dma.vmem_to_hbm [thread:$0]  %s612, 128, %s6, [#allocation5]
        $region72: #{tpu_custom_call.1} parent=43 // pred_fallthru
          _
        // Predicated region
        $region73: #{tpu_custom_call.1} parent=43 // pred_check
          %p615 = pneg %p189
        $region74: #{tpu_custom_call.1} parent=43 // pred_check_branch
          %617 = sbr.rel (%p615) target = $region76
        $region75: #{tpu_custom_call.1} parent=43 // pred_region
          %618 = dma.done [#allocation5], 128
        $region76: #{tpu_custom_call.1} parent=43 // pred_fallthru
          _
      $region44: #{tpu_custom_call.1} parent=5 // pred_fallthru
        _
      %p619 = scmp.le.s32.totalorder 2, %s20
      // Predicated region
      $region77: #{tpu_custom_call.1} parent=5 // pred_check
        %p620 = pneg %p619
      $region78: #{tpu_custom_call.1} parent=5 // pred_check_branch
        %622 = sbr.rel (%p620) target = $region80
      $region79: #{tpu_custom_call.1} parent=5 // pred_region
        %s623 = ssub.s32 %s20, 2
      $region80: #{tpu_custom_call.1} parent=5 // pred_fallthru
        _
    $region6: #{tpu_custom_call.1} parent=1 // loop_footer
      %s24 = sadd.s32 1, %s20
    $region7: #{tpu_custom_call.1} parent=1 // loop_footer_branch
      %19 = sbr.rel target = $region3
    $region8: #{tpu_custom_call.1} parent=1 // loop_exit
      _
    %624 = vsyncpa [#allocation4], 1
    %s625 = scalar_lea.sflag [#allocation4], 1
    %626 = vsyncpa %s625, 1
    %627 = vsyncpa [#allocation7], 1
    %s628 = scalar_lea.sflag [#allocation7], 1
    %629 = vsyncpa %s628, 1
    %630 = vsyncpa [#allocation10], 1
    %s631 = scalar_lea.sflag [#allocation10], 1
    %632 = vsyncpa %s631, 1
    %633 = vsyncpa [#allocation5], 1
    %s634 = scalar_lea.sflag [#allocation5], 1
    %635 = vsyncpa %s634, 1

</llo_original>
